<compile_context>
chip_gen: v7x
topology: tpu7x:2x2x1
jax: 0.10.0
libtpu: 0.0.40
codegen_flags: <defaults>
</compile_context>

<pallas_src>
import jax
import jax.numpy as jnp
from jax.experimental import pallas as pl
from jax.experimental.pallas import tpu as pltpu

# ---------------------------------------------------------------------------
# Static configuration (matches __init__ constraints:
#   len(chain) % (len(projection_list) - 1) == 0,
#   interval = len(chain) // (len(projection_list) - 1))
# ---------------------------------------------------------------------------
EFFECTIVE_DIM = 16
AUG_DIM = 16
NUM_PROJ = 3                                  # len(projection_list) == len(aug_list)
NUM_CHAIN = 4                                 # len(chain)
INTERVAL = NUM_CHAIN // (NUM_PROJ - 1)        # = 2
NUM_GROUPS = NUM_PROJ - 1                     # number of chain "interval" groups


def _round_up(a, m):
    return (a + m - 1) // m * m


def _affine_aug_kernel(x_ref, lp_ref,
                       aug_w_ref, aug_b_ref,
                       proj_w_ref, proj_b_ref,
                       out_x_ref, out_lp_ref):
    # x_ref : (TB, EFF+AUG) batch-major block.
    # lp_ref: (1, TB) feature-major (lane axis = batch).
    # Transpose once to feature-major so all VPU/EUP/XLU work is lane-dense.
    xz = jnp.transpose(x_ref[...])            # (EFF+AUG, TB)
    x = xz[:EFFECTIVE_DIM, :]                 # (EFF, TB) 8-aligned sublane slice
    z = xz[EFFECTIVE_DIM:, :]                 # (AUG, TB)
    lp = lp_ref[...]                          # (1, TB)

    # Fused: aug model -> projection -> affine modulation (chain group already
    # folded into the projection weights in the wrapper).
    for i in range(NUM_PROJ):
        z = jnp.tanh(
            jnp.dot(aug_w_ref[i], z, preferred_element_type=jnp.float32)
            + aug_b_ref[i])
        ss = (jnp.dot(proj_w_ref[i], z, preferred_element_type=jnp.float32)
              + proj_b_ref[i])                # (2*EFF, TB) single MXU push
        ls = ss[:EFFECTIVE_DIM, :]            # free sublane slices
        sh = ss[EFFECTIVE_DIM:, :]
        x = x * jnp.exp(ls) + sh
        lp = lp - jnp.sum(ls, axis=0, keepdims=True)   # sublane reduce, lane-dense

    out_x_ref[...] = jnp.transpose(x).astype(out_x_ref.dtype)   # back to (TB, EFF)
    out_lp_ref[...] = lp.astype(out_lp_ref.dtype)


@jax.jit
def affine_aug_flow(x, logpx, aug_w, aug_b, proj_w, proj_b, chain_w, chain_b):
    """x: (B, EFF+AUG) f32, logpx: (B, 1) f32  ->  (B, EFF), (B, 1)."""
    B = x.shape[0]

    # Adaptive batch tile on the sublane axis of the batch-major blocks:
    # aim for ~4 grid steps (megacore split on v7x + pipelining), cap at 8192.
    TB = min(8192, max(128, _round_up(pl.cdiv(B, 4), 128)))
    B_pad = _round_up(B, TB)
    grid = (B_pad // TB,)

    # ---- fold the batch-independent chain (ActNorm) layers into the
    #      projection parameters of the modulation that precedes them --------
    # Group j covers chain layers [j*INTERVAL, (j+1)*INTERVAL):
    #   composite: x -> x * S_j + T_j,  logS_j = sum of chain_w in the group.
    logS_rows, T_rows = [], []
    for j in range(NUM_GROUPS):
        logS = jnp.zeros((EFFECTIVE_DIM,), jnp.float32)
        T = jnp.zeros((EFFECTIVE_DIM,), jnp.float32)
        for i in range(j * INTERVAL, (j + 1) * INTERVAL):
            e = jnp.exp(chain_w[i])
            T = T * e + chain_b[i]
            logS = logS + chain_w[i]
        logS_rows.append(logS)
        T_rows.append(T)
    # Last projection has no trailing chain group -> identity fold.
    zero = jnp.zeros((EFFECTIVE_DIM,), jnp.float32)
    logS_all = jnp.stack(logS_rows + [zero])          # (P, EFF)
    T_all = jnp.stack(T_rows + [zero])                # (P, EFF)
    S_all = jnp.exp(logS_all)                         # (P, EFF)

    # ---- feature-major (pre-transposed) weights with the fold applied -------
    aug_wT = jnp.transpose(aug_w, (0, 2, 1))          # (P, AUG, AUG)
    aug_bT = aug_b[:, :, None]                        # (P, AUG, 1)
    proj_wT = jnp.transpose(proj_w, (0, 2, 1))        # (P, 2*EFF, AUG)
    ls_w = proj_wT[:, :EFFECTIVE_DIM, :]
    sh_w = proj_wT[:, EFFECTIVE_DIM:, :] * S_all[:, :, None]
    ls_b = proj_b[:, :EFFECTIVE_DIM, None] + logS_all[:, :, None]
    sh_b = proj_b[:, EFFECTIVE_DIM:, None] * S_all[:, :, None] + T_all[:, :, None]
    proj_wT = jnp.concatenate([ls_w, sh_w], axis=1)   # (P, 2*EFF, AUG)
    proj_bT = jnp.concatenate([ls_b, sh_b], axis=1)   # (P, 2*EFF, 1)

    # ---- batch-major data (no wrapper transposes; (B,1)<->(1,B) is a free
    #      reshape); pad the batch only when it is not a tile multiple --------
    lp = jnp.reshape(logpx, (1, B))
    if B_pad != B:
        x = jnp.pad(x, ((0, B_pad - B), (0, 0)))
        lp = jnp.pad(lp, ((0, 0), (0, B_pad - B)))

    # Advisory cost estimate for the XLA scheduler.
    flops = int(B_pad * (2 * NUM_PROJ * (AUG_DIM * AUG_DIM
                                         + AUG_DIM * 2 * EFFECTIVE_DIM)
                         + NUM_PROJ * (3 * EFFECTIVE_DIM + AUG_DIM + 1)))
    transcendentals = int(B_pad * NUM_PROJ * (AUG_DIM + EFFECTIVE_DIM))
    weight_elems = aug_wT.size + aug_bT.size + proj_wT.size + proj_bT.size
    bytes_accessed = int(4 * (B_pad * (EFFECTIVE_DIM + AUG_DIM + 1)
                              + B_pad * (EFFECTIVE_DIM + 1)
                              + weight_elems))

    out_x, out_lp = pl.pallas_call(
        _affine_aug_kernel,
        grid=grid,
        out_shape=(jax.ShapeDtypeStruct((B_pad, EFFECTIVE_DIM), jnp.float32),
                   jax.ShapeDtypeStruct((1, B_pad), jnp.float32)),
        in_specs=[
            pl.BlockSpec((TB, EFFECTIVE_DIM + AUG_DIM), lambda i: (i, 0)),  # x
            pl.BlockSpec((1, TB), lambda i: (0, i)),                         # logpx
            pl.BlockSpec(aug_wT.shape, lambda i: (0, 0, 0)),   # VMEM-resident params
            pl.BlockSpec(aug_bT.shape, lambda i: (0, 0, 0)),
            pl.BlockSpec(proj_wT.shape, lambda i: (0, 0, 0)),
            pl.BlockSpec(proj_bT.shape, lambda i: (0, 0, 0)),
        ],
        out_specs=(pl.BlockSpec((TB, EFFECTIVE_DIM), lambda i: (i, 0)),
                   pl.BlockSpec((1, TB), lambda i: (0, i))),
        compiler_params=pltpu.CompilerParams(dimension_semantics=("parallel",)),
        cost_estimate=pl.CostEstimate(flops=flops,
                                      transcendentals=transcendentals,
                                      bytes_accessed=bytes_accessed),
    )(x, lp, aug_wT, aug_bT, proj_wT, proj_bT)

    if B_pad != B:
        out_x = out_x[:B]
        out_lp = out_lp[:, :B]
    return out_x, jnp.reshape(out_lp, (B, 1))


def reference_forward(x, logpx, aug_w, aug_b, proj_w, proj_b, chain_w, chain_b):
    """Pure-JAX transliteration of AffineAugSequentialFlow.forward(logpx=...)."""
    z = x[:, EFFECTIVE_DIM:]
    xx = x[:, :EFFECTIVE_DIM]
    logscale_lst, shift_lst = [], []
    for i in range(NUM_PROJ):
        z = jnp.tanh(z @ aug_w[i] + aug_b[i])
        ss = z @ proj_w[i] + proj_b[i]
        logscale_lst.append(ss[:, :EFFECTIVE_DIM])
        shift_lst.append(ss[:, EFFECTIVE_DIM:])
    lp = logpx
    for i in range(NUM_CHAIN):
        if i % INTERVAL == 0:
            xx = xx * jnp.exp(logscale_lst[i // INTERVAL]) + shift_lst[i // INTERVAL]
            lp = lp - jnp.sum(logscale_lst[i // INTERVAL], axis=-1, keepdims=True)
        xx = xx * jnp.exp(chain_w[i]) + chain_b[i]
        lp = lp - jnp.sum(chain_w[i], axis=-1, keepdims=True)
    xx = xx * jnp.exp(logscale_lst[-1]) + shift_lst[-1]
    lp = lp - jnp.sum(logscale_lst[-1], axis=-1, keepdims=True)
    return xx, lp


if __name__ == "__main__":
    key = jax.random.PRNGKey(0)
    ks = jax.random.split(key, 8)

    # deterministic parameters (small scale so exp() stays tame)
    aug_w = 0.1 * jax.random.normal(ks[0], (NUM_PROJ, AUG_DIM, AUG_DIM), jnp.float32)
    aug_b = 0.1 * jax.random.normal(ks[1], (NUM_PROJ, AUG_DIM), jnp.float32)
    proj_w = 0.1 * jax.random.normal(ks[2], (NUM_PROJ, AUG_DIM, 2 * EFFECTIVE_DIM), jnp.float32)
    proj_b = 0.1 * jax.random.normal(ks[3], (NUM_PROJ, 2 * EFFECTIVE_DIM), jnp.float32)
    chain_w = 0.1 * jax.random.normal(ks[4], (NUM_CHAIN, EFFECTIVE_DIM), jnp.float32)
    chain_b = 0.1 * jax.random.normal(ks[5], (NUM_CHAIN, EFFECTIVE_DIM), jnp.float32)

    ok = True
    for B in (8, 300):   # 300 exercises padding + a multi-step "parallel" grid
        x = jax.random.normal(ks[6], (B, EFFECTIVE_DIM + AUG_DIM), jnp.float32)
        logpx = jnp.zeros((B, 1), jnp.float32)

        out_x, out_logpx = affine_aug_flow(
            x, logpx, aug_w, aug_b, proj_w, proj_b, chain_w, chain_b)
        jax.block_until_ready((out_x, out_logpx))

        ref_x, ref_logpx = reference_forward(
            x, logpx, aug_w, aug_b, proj_w, proj_b, chain_w, chain_b)

        ok &= bool(jnp.allclose(out_x, ref_x, atol=1e-3, rtol=1e-3))
        ok &= bool(jnp.allclose(out_logpx, ref_logpx, atol=1e-3, rtol=1e-3))

    assert ok, "mismatch vs reference"
    print("KERNEL_OK")
</pallas_src>

<mosaic_0001>
module attributes {stable_mosaic.version = 11 : i64} {
  func.func @_affine_aug_kernel(%arg0: i32, %arg1: memref<128x32xf32, #tpu.memory_space<vmem>>, %arg2: memref<1x128xf32, #tpu.memory_space<vmem>>, %arg3: memref<3x16x16xf32, #tpu.memory_space<vmem>>, %arg4: memref<3x16x1xf32, #tpu.memory_space<vmem>>, %arg5: memref<3x32x16xf32, #tpu.memory_space<vmem>>, %arg6: memref<3x32x1xf32, #tpu.memory_space<vmem>>, %arg7: memref<128x16xf32, #tpu.memory_space<vmem>>, %arg8: memref<1x128xf32, #tpu.memory_space<vmem>>) attributes {dimension_semantics = [#tpu.dimension_semantics<parallel>], iteration_bounds = array<i64: 1>, scalar_prefetch = 0 : i64, scratch_operands = 0 : i64, tpu.core_type = #tpu.core_type<tc>, window_params = [{transform_indices = @transform_0, window_bounds = array<i64: 128, 32>}, {transform_indices = @transform_1, window_bounds = array<i64: 1, 128>}, {pipeline_mode = #tpu.pipeline_mode<synchronous>, transform_indices = @transform_2, window_bounds = array<i64: 3, 16, 16>}, {pipeline_mode = #tpu.pipeline_mode<synchronous>, transform_indices = @transform_3, window_bounds = array<i64: 3, 16, 1>}, {pipeline_mode = #tpu.pipeline_mode<synchronous>, transform_indices = @transform_4, window_bounds = array<i64: 3, 32, 16>}, {pipeline_mode = #tpu.pipeline_mode<synchronous>, transform_indices = @transform_5, window_bounds = array<i64: 3, 32, 1>}, {transform_indices = @transform_6, window_bounds = array<i64: 128, 16>}, {transform_indices = @transform_7, window_bounds = array<i64: 1, 128>}]} {
    %c0 = arith.constant 0 : index
    %c0_0 = arith.constant 0 : index
    %0 = vector.load %arg1[%c0, %c0_0] : memref<128x32xf32, #tpu.memory_space<vmem>>, vector<128x32xf32>
    %1 = tpu.transpose %0, [1, 0] : vector<128x32xf32> -> vector<32x128xf32>
    %2 = vector.extract_strided_slice %1 {offsets = [0, 0], sizes = [16, 128], strides = [1, 1]} : vector<32x128xf32> to vector<16x128xf32>
    %3 = vector.extract_strided_slice %1 {offsets = [16, 0], sizes = [16, 128], strides = [1, 1]} : vector<32x128xf32> to vector<16x128xf32>
    %c0_1 = arith.constant 0 : index
    %c0_2 = arith.constant 0 : index
    %4 = vector.load %arg2[%c0_1, %c0_2] : memref<1x128xf32, #tpu.memory_space<vmem>>, vector<1x128xf32>
    %c0_3 = arith.constant 0 : index
    %c0_4 = arith.constant 0 : index
    %c0_5 = arith.constant 0 : index
    %5 = vector.load %arg3[%c0_3, %c0_4, %c0_5] : memref<3x16x16xf32, #tpu.memory_space<vmem>>, vector<1x16x16xf32>
    %6 = vector.shape_cast %5 : vector<1x16x16xf32> to vector<16x16xf32>
    %cst = arith.constant dense<0.000000e+00> : vector<16x128xf32>
    %7 = tpu.matmul %6, %3, %cst {dimension_numbers = #tpu.dot_dimension_numbers<[1], [0], [0], [1], [0, 0, 1, 1], [], []>} : vector<16x16xf32>, vector<16x128xf32>, vector<16x128xf32> -> vector<16x128xf32>
    %c0_6 = arith.constant 0 : index
    %c0_7 = arith.constant 0 : index
    %c0_8 = arith.constant 0 : index
    %8 = vector.load %arg4[%c0_6, %c0_7, %c0_8] : memref<3x16x1xf32, #tpu.memory_space<vmem>>, vector<1x16x1xf32>
    %9 = vector.shape_cast %8 : vector<1x16x1xf32> to vector<16x1xf32>
    %10 = vector.broadcast %9 : vector<16x1xf32> to vector<16x128xf32>
    %11 = arith.addf %7, %10 : vector<16x128xf32>
    %12 = math.tanh %11 : vector<16x128xf32>
    %c0_9 = arith.constant 0 : index
    %c0_10 = arith.constant 0 : index
    %c0_11 = arith.constant 0 : index
    %13 = vector.load %arg5[%c0_9, %c0_10, %c0_11] : memref<3x32x16xf32, #tpu.memory_space<vmem>>, vector<1x32x16xf32>
    %14 = vector.shape_cast %13 : vector<1x32x16xf32> to vector<32x16xf32>
    %cst_12 = arith.constant dense<0.000000e+00> : vector<32x128xf32>
    %15 = tpu.matmul %14, %12, %cst_12 {dimension_numbers = #tpu.dot_dimension_numbers<[1], [0], [0], [1], [0, 0, 1, 1], [], []>} : vector<32x16xf32>, vector<16x128xf32>, vector<32x128xf32> -> vector<32x128xf32>
    %c0_13 = arith.constant 0 : index
    %c0_14 = arith.constant 0 : index
    %c0_15 = arith.constant 0 : index
    %16 = vector.load %arg6[%c0_13, %c0_14, %c0_15] : memref<3x32x1xf32, #tpu.memory_space<vmem>>, vector<1x32x1xf32>
    %17 = vector.shape_cast %16 : vector<1x32x1xf32> to vector<32x1xf32>
    %18 = vector.broadcast %17 : vector<32x1xf32> to vector<32x128xf32>
    %19 = arith.addf %15, %18 : vector<32x128xf32>
    %20 = vector.extract_strided_slice %19 {offsets = [0, 0], sizes = [16, 128], strides = [1, 1]} : vector<32x128xf32> to vector<16x128xf32>
    %21 = vector.extract_strided_slice %19 {offsets = [16, 0], sizes = [16, 128], strides = [1, 1]} : vector<32x128xf32> to vector<16x128xf32>
    %22 = math.exp %20 : vector<16x128xf32>
    %23 = arith.mulf %2, %22 : vector<16x128xf32>
    %24 = arith.addf %23, %21 : vector<16x128xf32>
    %cst_16 = arith.constant dense<0.000000e+00> : vector<128xf32>
    %25 = vector.multi_reduction <add>, %20, %cst_16 [0] : vector<16x128xf32> to vector<128xf32>
    %26 = vector.shape_cast %25 : vector<128xf32> to vector<1x128xf32>
    %27 = arith.subf %4, %26 : vector<1x128xf32>
    %c1 = arith.constant 1 : index
    %c0_17 = arith.constant 0 : index
    %c0_18 = arith.constant 0 : index
    %28 = vector.load %arg3[%c1, %c0_17, %c0_18] : memref<3x16x16xf32, #tpu.memory_space<vmem>>, vector<1x16x16xf32>
    %29 = vector.shape_cast %28 : vector<1x16x16xf32> to vector<16x16xf32>
    %cst_19 = arith.constant dense<0.000000e+00> : vector<16x128xf32>
    %30 = tpu.matmul %29, %12, %cst_19 {dimension_numbers = #tpu.dot_dimension_numbers<[1], [0], [0], [1], [0, 0, 1, 1], [], []>} : vector<16x16xf32>, vector<16x128xf32>, vector<16x128xf32> -> vector<16x128xf32>
    %c1_20 = arith.constant 1 : index
    %c0_21 = arith.constant 0 : index
    %c0_22 = arith.constant 0 : index
    %31 = vector.load %arg4[%c1_20, %c0_21, %c0_22] : memref<3x16x1xf32, #tpu.memory_space<vmem>>, vector<1x16x1xf32>
    %32 = vector.shape_cast %31 : vector<1x16x1xf32> to vector<16x1xf32>
    %33 = vector.broadcast %32 : vector<16x1xf32> to vector<16x128xf32>
    %34 = arith.addf %30, %33 : vector<16x128xf32>
    %35 = math.tanh %34 : vector<16x128xf32>
    %c1_23 = arith.constant 1 : index
    %c0_24 = arith.constant 0 : index
    %c0_25 = arith.constant 0 : index
    %36 = vector.load %arg5[%c1_23, %c0_24, %c0_25] : memref<3x32x16xf32, #tpu.memory_space<vmem>>, vector<1x32x16xf32>
    %37 = vector.shape_cast %36 : vector<1x32x16xf32> to vector<32x16xf32>
    %cst_26 = arith.constant dense<0.000000e+00> : vector<32x128xf32>
    %38 = tpu.matmul %37, %35, %cst_26 {dimension_numbers = #tpu.dot_dimension_numbers<[1], [0], [0], [1], [0, 0, 1, 1], [], []>} : vector<32x16xf32>, vector<16x128xf32>, vector<32x128xf32> -> vector<32x128xf32>
    %c1_27 = arith.constant 1 : index
    %c0_28 = arith.constant 0 : index
    %c0_29 = arith.constant 0 : index
    %39 = vector.load %arg6[%c1_27, %c0_28, %c0_29] : memref<3x32x1xf32, #tpu.memory_space<vmem>>, vector<1x32x1xf32>
    %40 = vector.shape_cast %39 : vector<1x32x1xf32> to vector<32x1xf32>
    %41 = vector.broadcast %40 : vector<32x1xf32> to vector<32x128xf32>
    %42 = arith.addf %38, %41 : vector<32x128xf32>
    %43 = vector.extract_strided_slice %42 {offsets = [0, 0], sizes = [16, 128], strides = [1, 1]} : vector<32x128xf32> to vector<16x128xf32>
    %44 = vector.extract_strided_slice %42 {offsets = [16, 0], sizes = [16, 128], strides = [1, 1]} : vector<32x128xf32> to vector<16x128xf32>
    %45 = math.exp %43 : vector<16x128xf32>
    %46 = arith.mulf %24, %45 : vector<16x128xf32>
    %47 = arith.addf %46, %44 : vector<16x128xf32>
    %cst_30 = arith.constant dense<0.000000e+00> : vector<128xf32>
    %48 = vector.multi_reduction <add>, %43, %cst_30 [0] : vector<16x128xf32> to vector<128xf32>
    %49 = vector.shape_cast %48 : vector<128xf32> to vector<1x128xf32>
    %50 = arith.subf %27, %49 : vector<1x128xf32>
    %c2 = arith.constant 2 : index
    %c0_31 = arith.constant 0 : index
    %c0_32 = arith.constant 0 : index
    %51 = vector.load %arg3[%c2, %c0_31, %c0_32] : memref<3x16x16xf32, #tpu.memory_space<vmem>>, vector<1x16x16xf32>
    %52 = vector.shape_cast %51 : vector<1x16x16xf32> to vector<16x16xf32>
    %cst_33 = arith.constant dense<0.000000e+00> : vector<16x128xf32>
    %53 = tpu.matmul %52, %35, %cst_33 {dimension_numbers = #tpu.dot_dimension_numbers<[1], [0], [0], [1], [0, 0, 1, 1], [], []>} : vector<16x16xf32>, vector<16x128xf32>, vector<16x128xf32> -> vector<16x128xf32>
    %c2_34 = arith.constant 2 : index
    %c0_35 = arith.constant 0 : index
    %c0_36 = arith.constant 0 : index
    %54 = vector.load %arg4[%c2_34, %c0_35, %c0_36] : memref<3x16x1xf32, #tpu.memory_space<vmem>>, vector<1x16x1xf32>
    %55 = vector.shape_cast %54 : vector<1x16x1xf32> to vector<16x1xf32>
    %56 = vector.broadcast %55 : vector<16x1xf32> to vector<16x128xf32>
    %57 = arith.addf %53, %56 : vector<16x128xf32>
    %58 = math.tanh %57 : vector<16x128xf32>
    %c2_37 = arith.constant 2 : index
    %c0_38 = arith.constant 0 : index
    %c0_39 = arith.constant 0 : index
    %59 = vector.load %arg5[%c2_37, %c0_38, %c0_39] : memref<3x32x16xf32, #tpu.memory_space<vmem>>, vector<1x32x16xf32>
    %60 = vector.shape_cast %59 : vector<1x32x16xf32> to vector<32x16xf32>
    %cst_40 = arith.constant dense<0.000000e+00> : vector<32x128xf32>
    %61 = tpu.matmul %60, %58, %cst_40 {dimension_numbers = #tpu.dot_dimension_numbers<[1], [0], [0], [1], [0, 0, 1, 1], [], []>} : vector<32x16xf32>, vector<16x128xf32>, vector<32x128xf32> -> vector<32x128xf32>
    %c2_41 = arith.constant 2 : index
    %c0_42 = arith.constant 0 : index
    %c0_43 = arith.constant 0 : index
    %62 = vector.load %arg6[%c2_41, %c0_42, %c0_43] : memref<3x32x1xf32, #tpu.memory_space<vmem>>, vector<1x32x1xf32>
    %63 = vector.shape_cast %62 : vector<1x32x1xf32> to vector<32x1xf32>
    %64 = vector.broadcast %63 : vector<32x1xf32> to vector<32x128xf32>
    %65 = arith.addf %61, %64 : vector<32x128xf32>
    %66 = vector.extract_strided_slice %65 {offsets = [0, 0], sizes = [16, 128], strides = [1, 1]} : vector<32x128xf32> to vector<16x128xf32>
    %67 = vector.extract_strided_slice %65 {offsets = [16, 0], sizes = [16, 128], strides = [1, 1]} : vector<32x128xf32> to vector<16x128xf32>
    %68 = math.exp %66 : vector<16x128xf32>
    %69 = arith.mulf %47, %68 : vector<16x128xf32>
    %70 = arith.addf %69, %67 : vector<16x128xf32>
    %cst_44 = arith.constant dense<0.000000e+00> : vector<128xf32>
    %71 = vector.multi_reduction <add>, %66, %cst_44 [0] : vector<16x128xf32> to vector<128xf32>
    %72 = vector.shape_cast %71 : vector<128xf32> to vector<1x128xf32>
    %73 = arith.subf %50, %72 : vector<1x128xf32>
    %74 = tpu.transpose %70, [1, 0] : vector<16x128xf32> -> vector<128x16xf32>
    %c0_45 = arith.constant 0 : index
    %c0_46 = arith.constant 0 : index
    %75 = vector.load %arg7[%c0_45, %c0_46] : memref<128x16xf32, #tpu.memory_space<vmem>>, vector<128x16xf32>
    tpu.vector_store %arg7[%c0_45, %c0_46], %74 {strides = array<i32>} : memref<128x16xf32, #tpu.memory_space<vmem>>, vector<128x16xf32>,
    %c0_47 = arith.constant 0 : index
    %c0_48 = arith.constant 0 : index
    %76 = vector.load %arg8[%c0_47, %c0_48] : memref<1x128xf32, #tpu.memory_space<vmem>>, vector<1x128xf32>
    tpu.vector_store %arg8[%c0_47, %c0_48], %73 {strides = array<i32>} : memref<1x128xf32, #tpu.memory_space<vmem>>, vector<1x128xf32>,
    return
  }
  func.func @transform_0(%arg0: i32) -> (i32, i32) {
    %c0_i32 = arith.constant 0 : i32
    %c0_i32_0 = arith.constant 0 : i32
    return %arg0, %c0_i32 : i32, i32
  }
  func.func @transform_1(%arg0: i32) -> (i32, i32) {
    %c0_i32 = arith.constant 0 : i32
    %c0_i32_0 = arith.constant 0 : i32
    return %c0_i32, %arg0 : i32, i32
  }
  func.func @transform_2(%arg0: i32) -> (i32, i32, i32) {
    %c0_i32 = arith.constant 0 : i32
    %c0_i32_0 = arith.constant 0 : i32
    %c0_i32_1 = arith.constant 0 : i32
    %c0_i32_2 = arith.constant 0 : i32
    return %c0_i32, %c0_i32_0, %c0_i32_1 : i32, i32, i32
  }
  func.func @transform_3(%arg0: i32) -> (i32, i32, i32) {
    %c0_i32 = arith.constant 0 : i32
    %c0_i32_0 = arith.constant 0 : i32
    %c0_i32_1 = arith.constant 0 : i32
    %c0_i32_2 = arith.constant 0 : i32
    return %c0_i32, %c0_i32_0, %c0_i32_1 : i32, i32, i32
  }
  func.func @transform_4(%arg0: i32) -> (i32, i32, i32) {
    %c0_i32 = arith.constant 0 : i32
    %c0_i32_0 = arith.constant 0 : i32
    %c0_i32_1 = arith.constant 0 : i32
    %c0_i32_2 = arith.constant 0 : i32
    return %c0_i32, %c0_i32_0, %c0_i32_1 : i32, i32, i32
  }
  func.func @transform_5(%arg0: i32) -> (i32, i32, i32) {
    %c0_i32 = arith.constant 0 : i32
    %c0_i32_0 = arith.constant 0 : i32
    %c0_i32_1 = arith.constant 0 : i32
    %c0_i32_2 = arith.constant 0 : i32
    return %c0_i32, %c0_i32_0, %c0_i32_1 : i32, i32, i32
  }
  func.func @transform_6(%arg0: i32) -> (i32, i32) {
    %c0_i32 = arith.constant 0 : i32
    %c0_i32_0 = arith.constant 0 : i32
    return %arg0, %c0_i32 : i32, i32
  }
  func.func @transform_7(%arg0: i32) -> (i32, i32) {
    %c0_i32 = arith.constant 0 : i32
    %c0_i32_0 = arith.constant 0 : i32
    return %c0_i32, %arg0 : i32, i32
  }
}

</mosaic_0001>

<llo_original>
// kernel: affine_aug_flow.1
$region0: #{affine_aug_flow.1}
  #allocation0 [shape = 'u32[]', space=smem, size = 0x4, offset = 0x4, fixed_abs, tag = 'smem constant byte address 0x4 - core index']
  #allocation1 [shape = 'u32[144,128]{1,0:T(1,128)}', space=vmem, size = 0x12000, scoped, tag = 'internal scratch']
  %s0 = inlined_call_operand.vmem [shape: f32[128,32], index: 0, kind: input, shape index: {}]
  %s1 = inlined_call_operand.vmem [shape: f32[1,128], index: 1, kind: input, shape index: {}]
  %s2 = inlined_call_operand.vmem [shape: f32[3,16,16], index: 2, kind: input, shape index: {}]
  %s3 = inlined_call_operand.vmem [shape: f32[3,16,1], index: 3, kind: input, shape index: {}]
  %s4 = inlined_call_operand.vmem [shape: f32[3,32,16], index: 4, kind: input, shape index: {}]
  %s5 = inlined_call_operand.vmem [shape: f32[3,32,1], index: 5, kind: input, shape index: {}]
  %s6 = inlined_call_operand.vmem [shape: f32[128,16], index: 6, kind: output, shape index: {0}]
  %s7 = inlined_call_operand.vmem [shape: f32[1,128], index: 7, kind: output, shape index: {1}]
  %8 = xla_tuple %s6, %s7
  %s9 = sld [smem:[#allocation0]]
  $region42: #{affine_aug_flow.1} parent=0
    _
  %s11 = ssub.s32 1, %s9
  %s12 = scalar_select 0, %s11, %s9
  // Predicated region
  $region2: #{affine_aug_flow.1} parent=0 // pred_check
    _
  $region3: #{affine_aug_flow.1} parent=0 // pred_check_branch
    %14 = sbr.rel (0) target = $region5
  $region4: #{affine_aug_flow.1} parent=0 // pred_region
    _
  $region5: #{affine_aug_flow.1} parent=0 // pred_fallthru
    _
  // Predicated region
  $region6: #{affine_aug_flow.1} parent=0 // pred_check
    _
  $region7: #{affine_aug_flow.1} parent=0 // pred_check_branch
    %16 = sbr.rel (0) target = $region9
  $region8: #{affine_aug_flow.1} parent=0 // pred_region
    _
  $region9: #{affine_aug_flow.1} parent=0 // pred_fallthru
    _
  // Predicated region
  $region10: #{affine_aug_flow.1} parent=0 // pred_check
    _
  $region11: #{affine_aug_flow.1} parent=0 // pred_check_branch
    %18 = sbr.rel (0) target = $region13
  $region12: #{affine_aug_flow.1} parent=0 // pred_region
    _
  $region13: #{affine_aug_flow.1} parent=0 // pred_fallthru
    _
  // Predicated region
  $region14: #{affine_aug_flow.1} parent=0 // pred_check
    _
  $region15: #{affine_aug_flow.1} parent=0 // pred_check_branch
    %20 = sbr.rel (0) target = $region17
  $region16: #{affine_aug_flow.1} parent=0 // pred_region
    _
  $region17: #{affine_aug_flow.1} parent=0 // pred_fallthru
    _
  // Predicated region
  $region18: #{affine_aug_flow.1} parent=0 // pred_check
    _
  $region19: #{affine_aug_flow.1} parent=0 // pred_check_branch
    %22 = sbr.rel (0) target = $region21
  $region20: #{affine_aug_flow.1} parent=0 // pred_region
    _
  $region21: #{affine_aug_flow.1} parent=0 // pred_fallthru
    _
  // Predicated region
  $region22: #{affine_aug_flow.1} parent=0 // pred_check
    _
  $region23: #{affine_aug_flow.1} parent=0 // pred_check_branch
    %24 = sbr.rel (0) target = $region25
  $region24: #{affine_aug_flow.1} parent=0 // pred_region
    _
  $region25: #{affine_aug_flow.1} parent=0 // pred_fallthru
    _
  %v25 = vld [vmem:[%s0] sm:$0xff]
  %v26 = vld [vmem:[%s0 + $0x8] sm:$0xff]
  %v27 = vld [vmem:[%s0 + $0x10] sm:$0xff]
  %v28 = vld [vmem:[%s0 + $0x18] sm:$0xff]
  %v29 = vld [vmem:[%s0 + $0x20] sm:$0xff]
  %v30 = vld [vmem:[%s0 + $0x28] sm:$0xff]
  %v31 = vld [vmem:[%s0 + $0x30] sm:$0xff]
  %v32 = vld [vmem:[%s0 + $0x38] sm:$0xff]
  %v33 = vld [vmem:[%s0 + $0x40] sm:$0xff]
  %v34 = vld [vmem:[%s0 + $0x48] sm:$0xff]
  %v35 = vld [vmem:[%s0 + $0x50] sm:$0xff]
  %v36 = vld [vmem:[%s0 + $0x58] sm:$0xff]
  %v37 = vld [vmem:[%s0 + $0x60] sm:$0xff]
  %v38 = vld [vmem:[%s0 + $0x68] sm:$0xff]
  %v39 = vld [vmem:[%s0 + $0x70] sm:$0xff]
  %v40 = vld [vmem:[%s0 + $0x78] sm:$0xff]
  %41 = vxpose.xlu0.b32.start [1/16] %v25, 128
  %42 = vxpose.xlu0.b32.cont [2/16] %v26, 128
  %43 = vxpose.xlu0.b32.cont [3/16] %v27, 128
  %44 = vxpose.xlu0.b32.cont [4/16] %v28, 128
  %45 = vxpose.xlu0.b32.cont [5/16] %v29, 128
  %46 = vxpose.xlu0.b32.cont [6/16] %v30, 128
  %47 = vxpose.xlu0.b32.cont [7/16] %v31, 128
  %48 = vxpose.xlu0.b32.cont [8/16] %v32, 128
  %49 = vxpose.xlu0.b32.cont [9/16] %v33, 128
  %50 = vxpose.xlu0.b32.cont [10/16] %v34, 128
  %51 = vxpose.xlu0.b32.cont [11/16] %v35, 128
  %52 = vxpose.xlu0.b32.cont [12/16] %v36, 128
  %53 = vxpose.xlu0.b32.cont [13/16] %v37, 128
  %54 = vxpose.xlu0.b32.cont [14/16] %v38, 128
  %55 = vxpose.xlu0.b32.cont [15/16] %v39, 128
  %56 = vxpose.xlu0.b32.end [16/16] %v40, 128
  %v57 = vpop.trf.xlu0
  %v58 = vpop.trf.xlu0
  %v59 = vpop.trf.xlu0
  %v60 = vpop.trf.xlu0
  %v61 = vpop.trf.xlu0
  %v62 = vpop.trf.xlu0
  %v63 = vpop.trf.xlu0
  %v64 = vpop.trf.xlu0
  %v65 = vpop.trf.xlu0
  %v66 = vpop.trf.xlu0
  %v67 = vpop.trf.xlu0
  %v68 = vpop.trf.xlu0
  %v69 = vpop.trf.xlu0
  %v70 = vpop.trf.xlu0
  %v71 = vpop.trf.xlu0
  %v72 = vpop.trf.xlu0
  %v73 = vld [vmem:[%s1] sm:$0x1]
  %v74 = vld [vmem:[%s2] sm:$0xff]
  %v75 = vld [vmem:[%s2 + $0x8] sm:$0xff]
  %v76 = vld [vmem:[%s3] sm:$0xff]
  %v77 = vld [vmem:[%s3 + $0x8] sm:$0xff]
  %79 = vset.pattern.permute.xlu0 0
  %80 = vperm.xlu0 %79, %v76
  %v81 = vpop.permute.xlu0 %80
  %84 = vset.pattern.permute.xlu0 0
  %85 = vperm.xlu0 %84, %v77
  %v86 = vpop.permute.xlu0 %85
  %vm88 = vcmask 130048
  %v90 = vsel %vm88, %v74, 0
  %v93 = vsel %vm88, %v75, 0
  %95 = vmatprep.subr.mxu0 0.0
  %96 = vmatpush1.msra.mxu0 %v59
  %97 = vmatprep.subr.mxu0 0.0
  %98 = vmatpush1.msra.mxu0 %v60
  %99 = vmatprep.subr.mxu0 0.0
  %100 = vmatpush1.msra.mxu0 0.0
  %101 = vmatprep.subr.mxu0 0.0
  %102 = vmatpush1.msra.mxu0 0.0
  %103 = vmatprep.subr.mxu0 0.0
  %104 = vmatpush1.msra.mxu0 0.0
  %105 = vmatprep.subr.mxu0 0.0
  %106 = vmatpush1.msra.mxu0 0.0
  %107 = vmatprep.subr.mxu0 0.0
  %108 = vmatpush1.msra.mxu0 0.0
  %109 = vmatprep.subr.mxu0 0.0
  %110 = vmatpush1.msra.mxu0 0.0
  %111 = vmatprep.subr.mxu0 0.0
  %112 = vmatpush1.msra.mxu0 0.0
  %113 = vmatprep.subr.mxu0 0.0
  %114 = vmatpush1.msra.mxu0 0.0
  %115 = vmatprep.subr.mxu0 0.0
  %116 = vmatpush1.msra.mxu0 0.0
  %117 = vmatprep.subr.mxu0 0.0
  %118 = vmatpush1.msra.mxu0 0.0
  %119 = vmatprep.subr.mxu0 0.0
  %120 = vmatpush1.msra.mxu0 0.0
  %121 = vmatprep.subr.mxu0 0.0
  %122 = vmatpush1.msra.mxu0 0.0
  %123 = vmatprep.subr.mxu0 0.0
  %124 = vmatpush1.msra.mxu0 0.0
  %125 = vmatprep.subr.mxu0 0.0
  %126 = vmatpush1.msra.mxu0 0.0
  %127 = vmatprep.subr.mxu0 0.0
  %128 = vmatpush1.msra.mxu0 0.0
  %129 = vmatprep.subr.mxu0 0.0
  %130 = vmatpush1.msra.mxu0 0.0
  %131 = vmatprep.subr.mxu0 0.0
  %132 = vmatpush1.msra.mxu0 0.0
  %133 = vmatprep.subr.mxu0 0.0
  %134 = vmatpush1.msra.mxu0 0.0
  %135 = vmatprep.subr.mxu0 0.0
  %136 = vmatpush1.msra.mxu0 0.0
  %137 = vmatprep.subr.mxu0 0.0
  %138 = vmatpush1.msra.mxu0 0.0
  %139 = vmatprep.subr.mxu0 0.0
  %140 = vmatpush1.msra.mxu0 0.0
  %141 = vmatprep.subr.mxu0 0.0
  %142 = vmatpush1.msra.mxu0 0.0
  %143 = vmatprep.subr.mxu0 0.0
  %144 = vmatpush1.msra.mxu0 0.0
  %145 = vmatprep.subr.mxu0 0.0
  %146 = vmatpush1.msra.mxu0 0.0
  %147 = vmatprep.subr.mxu0 0.0
  %148 = vmatpush1.msra.mxu0 0.0
  %149 = vmatprep.subr.mxu0 0.0
  %150 = vmatpush1.msra.mxu0 0.0
  %151 = vmatprep.subr.mxu0 0.0
  %152 = vmatpush1.msra.mxu0 0.0
  %153 = vmatprep.subr.mxu0 0.0
  %154 = vmatpush1.msra.mxu0 0.0
  %155 = vmatprep.subr.mxu0 0.0
  %156 = vmatpush1.msra.mxu0 0.0
  %157 = vmatprep.subr.mxu0 0.0
  %158 = vmatpush1.msra.mxu0 0.0
  %159 = vmatprep.mubr.f32.mxu0 0.0
  %160 = vmatmul.mubr.f32.gmra.mrb[0].mxu0 %v90
  %v161 = vpop.f32.mrb[0].mxu0
  %v162 = vadd.f32 %v81, %v161
  %v163 = vpop.f32.mrb[0].mxu0
  %164 = vmatprep.mubr.f32.mxu0 0.0
  %165 = vmatmul.mubr.f32.gmra.mrb[0].mxu0 %v93
  %v166 = vpop.f32.mrb[0].mxu0
  %v167 = vadd.f32 %v86, %v166
  %v168 = vpop.f32.mrb[0].mxu0
  %169 = vdwg.mxu0
  %v170 = vtanh.pop %v162
  %v171 = vtanh.pop %v167
  %v172 = vld [vmem:[%s4] sm:$0xff]
  %v173 = vld [vmem:[%s4 + $0x8] sm:$0xff]
  %v174 = vld [vmem:[%s4 + $0x10] sm:$0xff]
  %v175 = vld [vmem:[%s4 + $0x18] sm:$0xff]
  %v176 = vld [vmem:[%s5] sm:$0xff]
  %v177 = vld [vmem:[%s5 + $0x8] sm:$0xff]
  %v178 = vld [vmem:[%s5 + $0x10] sm:$0xff]
  %v179 = vld [vmem:[%s5 + $0x18] sm:$0xff]
  %181 = vset.pattern.permute.xlu0 0
  %182 = vperm.xlu0 %181, %v176
  %v183 = vpop.permute.xlu0 %182
  %186 = vset.pattern.permute.xlu0 0
  %187 = vperm.xlu0 %186, %v177
  %v188 = vpop.permute.xlu0 %187
  %191 = vset.pattern.permute.xlu0 0
  %192 = vperm.xlu0 %191, %v178
  %v193 = vpop.permute.xlu0 %192
  %196 = vset.pattern.permute.xlu0 0
  %197 = vperm.xlu0 %196, %v179
  %v198 = vpop.permute.xlu0 %197
  %v201 = vsel %vm88, %v172, 0
  %v204 = vsel %vm88, %v173, 0
  %v207 = vsel %vm88, %v174, 0
  %v210 = vsel %vm88, %v175, 0
  %212 = vmatprep.subr.mxu0 0.0
  %213 = vmatpush1.msra.mxu0 %v170
  %214 = vmatprep.subr.mxu0 0.0
  %215 = vmatpush1.msra.mxu0 %v171
  %216 = vmatprep.subr.mxu0 0.0
  %217 = vmatpush1.msra.mxu0 0.0
  %218 = vmatprep.subr.mxu0 0.0
  %219 = vmatpush1.msra.mxu0 0.0
  %220 = vmatprep.subr.mxu0 0.0
  %221 = vmatpush1.msra.mxu0 0.0
  %222 = vmatprep.subr.mxu0 0.0
  %223 = vmatpush1.msra.mxu0 0.0
  %224 = vmatprep.subr.mxu0 0.0
  %225 = vmatpush1.msra.mxu0 0.0
  %226 = vmatprep.subr.mxu0 0.0
  %227 = vmatpush1.msra.mxu0 0.0
  %228 = vmatprep.subr.mxu0 0.0
  %229 = vmatpush1.msra.mxu0 0.0
  %230 = vmatprep.subr.mxu0 0.0
  %231 = vmatpush1.msra.mxu0 0.0
  %232 = vmatprep.subr.mxu0 0.0
  %233 = vmatpush1.msra.mxu0 0.0
  %234 = vmatprep.subr.mxu0 0.0
  %235 = vmatpush1.msra.mxu0 0.0
  %236 = vmatprep.subr.mxu0 0.0
  %237 = vmatpush1.msra.mxu0 0.0
  %238 = vmatprep.subr.mxu0 0.0
  %239 = vmatpush1.msra.mxu0 0.0
  %240 = vmatprep.subr.mxu0 0.0
  %241 = vmatpush1.msra.mxu0 0.0
  %242 = vmatprep.subr.mxu0 0.0
  %243 = vmatpush1.msra.mxu0 0.0
  %244 = vmatprep.subr.mxu0 0.0
  %245 = vmatpush1.msra.mxu0 0.0
  %246 = vmatprep.subr.mxu0 0.0
  %247 = vmatpush1.msra.mxu0 0.0
  %248 = vmatprep.subr.mxu0 0.0
  %249 = vmatpush1.msra.mxu0 0.0
  %250 = vmatprep.subr.mxu0 0.0
  %251 = vmatpush1.msra.mxu0 0.0
  %252 = vmatprep.subr.mxu0 0.0
  %253 = vmatpush1.msra.mxu0 0.0
  %254 = vmatprep.subr.mxu0 0.0
  %255 = vmatpush1.msra.mxu0 0.0
  %256 = vmatprep.subr.mxu0 0.0
  %257 = vmatpush1.msra.mxu0 0.0
  %258 = vmatprep.subr.mxu0 0.0
  %259 = vmatpush1.msra.mxu0 0.0
  %260 = vmatprep.subr.mxu0 0.0
  %261 = vmatpush1.msra.mxu0 0.0
  %262 = vmatprep.subr.mxu0 0.0
  %263 = vmatpush1.msra.mxu0 0.0
  %264 = vmatprep.subr.mxu0 0.0
  %265 = vmatpush1.msra.mxu0 0.0
  %266 = vmatprep.subr.mxu0 0.0
  %267 = vmatpush1.msra.mxu0 0.0
  %268 = vmatprep.subr.mxu0 0.0
  %269 = vmatpush1.msra.mxu0 0.0
  %270 = vmatprep.subr.mxu0 0.0
  %271 = vmatpush1.msra.mxu0 0.0
  %272 = vmatprep.subr.mxu0 0.0
  %273 = vmatpush1.msra.mxu0 0.0
  %274 = vmatprep.subr.mxu0 0.0
  %275 = vmatpush1.msra.mxu0 0.0
  %276 = vmatprep.mubr.f32.mxu0 0.0
  %277 = vmatmul.mubr.f32.gmra.mrb[0].mxu0 %v201
  %v278 = vpop.f32.mrb[0].mxu0
  %v279 = vadd.f32 %v183, %v278
  %v280 = vpop.f32.mrb[0].mxu0
  %281 = vmatprep.mubr.f32.mxu0 0.0
  %282 = vmatmul.mubr.f32.gmra.mrb[0].mxu0 %v204
  %v283 = vpop.f32.mrb[0].mxu0
  %v284 = vadd.f32 %v188, %v283
  %v285 = vpop.f32.mrb[0].mxu0
  %286 = vmatprep.mubr.f32.mxu0 0.0
  %287 = vmatmul.mubr.f32.gmra.mrb[0].mxu0 %v207
  %v288 = vpop.f32.mrb[0].mxu0
  %v289 = vadd.f32 %v193, %v288
  %v290 = vpop.f32.mrb[0].mxu0
  %291 = vmatprep.mubr.f32.mxu0 0.0
  %292 = vmatmul.mubr.f32.gmra.mrb[0].mxu0 %v210
  %v293 = vpop.f32.mrb[0].mxu0
  %v294 = vadd.f32 %v198, %v293
  %v295 = vpop.f32.mrb[0].mxu0
  %296 = vdwg.mxu0
  %v297 = vmul.f32 %v279, 1.442695
  %v298 = vpow.pop %v297
  %v299 = vmul.f32 %v284, 1.442695
  %v300 = vpow.pop %v299
  %v301 = vmul.f32 %v57, %v298
  %v302 = vmul.f32 %v58, %v300
  %v303 = vadd.f32 %v301, %v289
  %v304 = vadd.f32 %v302, %v294
  %v305 = vadd.f32 %v279, %v284
  %v306 = vrot.slane %v305, 4
  %v307 = vadd.f32 %v305, %v306
  %v308 = vrot.slane %v307, 2
  %v309 = vadd.f32 %v307, %v308
  %v310 = vrot.slane %v309, 1
  %v311 = vadd.f32 %v309, %v310
  %v312 = vsub.f32 %v73, %v311
  %s313 = scalar_lea.vmem %s2, 16
  %v314 = vld [vmem:[%s313] sm:$0xff]
  %v315 = vld [vmem:[%s313 + $0x8] sm:$0xff]
  %s316 = scalar_lea.vmem %s3, 16
  %v317 = vld [vmem:[%s316] sm:$0xff]
  %v318 = vld [vmem:[%s316 + $0x8] sm:$0xff]
  %320 = vset.pattern.permute.xlu0 0
  %321 = vperm.xlu0 %320, %v317
  %v322 = vpop.permute.xlu0 %321
  %325 = vset.pattern.permute.xlu0 0
  %326 = vperm.xlu0 %325, %v318
  %v327 = vpop.permute.xlu0 %326
  %v330 = vsel %vm88, %v314, 0
  %v333 = vsel %vm88, %v315, 0
  %335 = vmatprep.subr.mxu0 0.0
  %336 = vmatpush1.msra.mxu0 %v170
  %337 = vmatprep.subr.mxu0 0.0
  %338 = vmatpush1.msra.mxu0 %v171
  %339 = vmatprep.subr.mxu0 0.0
  %340 = vmatpush1.msra.mxu0 0.0
  %341 = vmatprep.subr.mxu0 0.0
  %342 = vmatpush1.msra.mxu0 0.0
  %343 = vmatprep.subr.mxu0 0.0
  %344 = vmatpush1.msra.mxu0 0.0
  %345 = vmatprep.subr.mxu0 0.0
  %346 = vmatpush1.msra.mxu0 0.0
  %347 = vmatprep.subr.mxu0 0.0
  %348 = vmatpush1.msra.mxu0 0.0
  %349 = vmatprep.subr.mxu0 0.0
  %350 = vmatpush1.msra.mxu0 0.0
  %351 = vmatprep.subr.mxu0 0.0
  %352 = vmatpush1.msra.mxu0 0.0
  %353 = vmatprep.subr.mxu0 0.0
  %354 = vmatpush1.msra.mxu0 0.0
  %355 = vmatprep.subr.mxu0 0.0
  %356 = vmatpush1.msra.mxu0 0.0
  %357 = vmatprep.subr.mxu0 0.0
  %358 = vmatpush1.msra.mxu0 0.0
  %359 = vmatprep.subr.mxu0 0.0
  %360 = vmatpush1.msra.mxu0 0.0
  %361 = vmatprep.subr.mxu0 0.0
  %362 = vmatpush1.msra.mxu0 0.0
  %363 = vmatprep.subr.mxu0 0.0
  %364 = vmatpush1.msra.mxu0 0.0
  %365 = vmatprep.subr.mxu0 0.0
  %366 = vmatpush1.msra.mxu0 0.0
  %367 = vmatprep.subr.mxu0 0.0
  %368 = vmatpush1.msra.mxu0 0.0
  %369 = vmatprep.subr.mxu0 0.0
  %370 = vmatpush1.msra.mxu0 0.0
  %371 = vmatprep.subr.mxu0 0.0
  %372 = vmatpush1.msra.mxu0 0.0
  %373 = vmatprep.subr.mxu0 0.0
  %374 = vmatpush1.msra.mxu0 0.0
  %375 = vmatprep.subr.mxu0 0.0
  %376 = vmatpush1.msra.mxu0 0.0
  %377 = vmatprep.subr.mxu0 0.0
  %378 = vmatpush1.msra.mxu0 0.0
  %379 = vmatprep.subr.mxu0 0.0
  %380 = vmatpush1.msra.mxu0 0.0
  %381 = vmatprep.subr.mxu0 0.0
  %382 = vmatpush1.msra.mxu0 0.0
  %383 = vmatprep.subr.mxu0 0.0
  %384 = vmatpush1.msra.mxu0 0.0
  %385 = vmatprep.subr.mxu0 0.0
  %386 = vmatpush1.msra.mxu0 0.0
  %387 = vmatprep.subr.mxu0 0.0
  %388 = vmatpush1.msra.mxu0 0.0
  %389 = vmatprep.subr.mxu0 0.0
  %390 = vmatpush1.msra.mxu0 0.0
  %391 = vmatprep.subr.mxu0 0.0
  %392 = vmatpush1.msra.mxu0 0.0
  %393 = vmatprep.subr.mxu0 0.0
  %394 = vmatpush1.msra.mxu0 0.0
  %395 = vmatprep.subr.mxu0 0.0
  %396 = vmatpush1.msra.mxu0 0.0
  %397 = vmatprep.subr.mxu0 0.0
  %398 = vmatpush1.msra.mxu0 0.0
  %399 = vmatprep.mubr.f32.mxu0 0.0
  %400 = vmatmul.mubr.f32.gmra.mrb[0].mxu0 %v330
  %v401 = vpop.f32.mrb[0].mxu0
  %v402 = vadd.f32 %v322, %v401
  %v403 = vpop.f32.mrb[0].mxu0
  %404 = vmatprep.mubr.f32.mxu0 0.0
  %405 = vmatmul.mubr.f32.gmra.mrb[0].mxu0 %v333
  %v406 = vpop.f32.mrb[0].mxu0
  %v407 = vadd.f32 %v327, %v406
  %v408 = vpop.f32.mrb[0].mxu0
  %409 = vdwg.mxu0
  %v410 = vtanh.pop %v402
  %v411 = vtanh.pop %v407
  %s412 = scalar_lea.vmem %s4, 32
  %v413 = vld [vmem:[%s412] sm:$0xff]
  %v414 = vld [vmem:[%s412 + $0x8] sm:$0xff]
  %v415 = vld [vmem:[%s412 + $0x10] sm:$0xff]
  %v416 = vld [vmem:[%s412 + $0x18] sm:$0xff]
  %s417 = scalar_lea.vmem %s5, 32
  %v418 = vld [vmem:[%s417] sm:$0xff]
  %v419 = vld [vmem:[%s417 + $0x8] sm:$0xff]
  %v420 = vld [vmem:[%s417 + $0x10] sm:$0xff]
  %v421 = vld [vmem:[%s417 + $0x18] sm:$0xff]
  %423 = vset.pattern.permute.xlu0 0
  %424 = vperm.xlu0 %423, %v418
  %v425 = vpop.permute.xlu0 %424
  %428 = vset.pattern.permute.xlu0 0
  %429 = vperm.xlu0 %428, %v419
  %v430 = vpop.permute.xlu0 %429
  %433 = vset.pattern.permute.xlu0 0
  %434 = vperm.xlu0 %433, %v420
  %v435 = vpop.permute.xlu0 %434
  %438 = vset.pattern.permute.xlu0 0
  %439 = vperm.xlu0 %438, %v421
  %v440 = vpop.permute.xlu0 %439
  %v443 = vsel %vm88, %v413, 0
  %v446 = vsel %vm88, %v414, 0
  %v449 = vsel %vm88, %v415, 0
  %v452 = vsel %vm88, %v416, 0
  %454 = vmatprep.subr.mxu0 0.0
  %455 = vmatpush1.msra.mxu0 %v410
  %456 = vmatprep.subr.mxu0 0.0
  %457 = vmatpush1.msra.mxu0 %v411
  %458 = vmatprep.subr.mxu0 0.0
  %459 = vmatpush1.msra.mxu0 0.0
  %460 = vmatprep.subr.mxu0 0.0
  %461 = vmatpush1.msra.mxu0 0.0
  %462 = vmatprep.subr.mxu0 0.0
  %463 = vmatpush1.msra.mxu0 0.0
  %464 = vmatprep.subr.mxu0 0.0
  %465 = vmatpush1.msra.mxu0 0.0
  %466 = vmatprep.subr.mxu0 0.0
  %467 = vmatpush1.msra.mxu0 0.0
  %468 = vmatprep.subr.mxu0 0.0
  %469 = vmatpush1.msra.mxu0 0.0
  %470 = vmatprep.subr.mxu0 0.0
  %471 = vmatpush1.msra.mxu0 0.0
  %472 = vmatprep.subr.mxu0 0.0
  %473 = vmatpush1.msra.mxu0 0.0
  %474 = vmatprep.subr.mxu0 0.0
  %475 = vmatpush1.msra.mxu0 0.0
  %476 = vmatprep.subr.mxu0 0.0
  %477 = vmatpush1.msra.mxu0 0.0
  %478 = vmatprep.subr.mxu0 0.0
  %479 = vmatpush1.msra.mxu0 0.0
  %480 = vmatprep.subr.mxu0 0.0
  %481 = vmatpush1.msra.mxu0 0.0
  %482 = vmatprep.subr.mxu0 0.0
  %483 = vmatpush1.msra.mxu0 0.0
  %484 = vmatprep.subr.mxu0 0.0
  %485 = vmatpush1.msra.mxu0 0.0
  %486 = vmatprep.subr.mxu0 0.0
  %487 = vmatpush1.msra.mxu0 0.0
  %488 = vmatprep.subr.mxu0 0.0
  %489 = vmatpush1.msra.mxu0 0.0
  %490 = vmatprep.subr.mxu0 0.0
  %491 = vmatpush1.msra.mxu0 0.0
  %492 = vmatprep.subr.mxu0 0.0
  %493 = vmatpush1.msra.mxu0 0.0
  %494 = vmatprep.subr.mxu0 0.0
  %495 = vmatpush1.msra.mxu0 0.0
  %496 = vmatprep.subr.mxu0 0.0
  %497 = vmatpush1.msra.mxu0 0.0
  %498 = vmatprep.subr.mxu0 0.0
  %499 = vmatpush1.msra.mxu0 0.0
  %500 = vmatprep.subr.mxu0 0.0
  %501 = vmatpush1.msra.mxu0 0.0
  %502 = vmatprep.subr.mxu0 0.0
  %503 = vmatpush1.msra.mxu0 0.0
  %504 = vmatprep.subr.mxu0 0.0
  %505 = vmatpush1.msra.mxu0 0.0
  %506 = vmatprep.subr.mxu0 0.0
  %507 = vmatpush1.msra.mxu0 0.0
  %508 = vmatprep.subr.mxu0 0.0
  %509 = vmatpush1.msra.mxu0 0.0
  %510 = vmatprep.subr.mxu0 0.0
  %511 = vmatpush1.msra.mxu0 0.0
  %512 = vmatprep.subr.mxu0 0.0
  %513 = vmatpush1.msra.mxu0 0.0
  %514 = vmatprep.subr.mxu0 0.0
  %515 = vmatpush1.msra.mxu0 0.0
  %516 = vmatprep.subr.mxu0 0.0
  %517 = vmatpush1.msra.mxu0 0.0
  %518 = vmatprep.mubr.f32.mxu0 0.0
  %519 = vmatmul.mubr.f32.gmra.mrb[0].mxu0 %v443
  %v520 = vpop.f32.mrb[0].mxu0
  %v521 = vadd.f32 %v425, %v520
  %v522 = vpop.f32.mrb[0].mxu0
  %523 = vmatprep.mubr.f32.mxu0 0.0
  %524 = vmatmul.mubr.f32.gmra.mrb[0].mxu0 %v446
  %v525 = vpop.f32.mrb[0].mxu0
  %v526 = vadd.f32 %v430, %v525
  %v527 = vpop.f32.mrb[0].mxu0
  %528 = vmatprep.mubr.f32.mxu0 0.0
  %529 = vmatmul.mubr.f32.gmra.mrb[0].mxu0 %v449
  %v530 = vpop.f32.mrb[0].mxu0
  %v531 = vadd.f32 %v435, %v530
  %v532 = vpop.f32.mrb[0].mxu0
  %533 = vmatprep.mubr.f32.mxu0 0.0
  %534 = vmatmul.mubr.f32.gmra.mrb[0].mxu0 %v452
  %v535 = vpop.f32.mrb[0].mxu0
  %v536 = vadd.f32 %v440, %v535
  %v537 = vpop.f32.mrb[0].mxu0
  %538 = vdwg.mxu0
  %v539 = vmul.f32 %v521, 1.442695
  %v540 = vpow.pop %v539
  %v541 = vmul.f32 %v526, 1.442695
  %v542 = vpow.pop %v541
  %v543 = vmul.f32 %v303, %v540
  %v544 = vmul.f32 %v304, %v542
  %v545 = vadd.f32 %v543, %v531
  %v546 = vadd.f32 %v544, %v536
  %v547 = vadd.f32 %v521, %v526
  %v548 = vrot.slane %v547, 4
  %v549 = vadd.f32 %v547, %v548
  %v550 = vrot.slane %v549, 2
  %v551 = vadd.f32 %v549, %v550
  %v552 = vrot.slane %v551, 1
  %v553 = vadd.f32 %v551, %v552
  %v554 = vsub.f32 %v312, %v553
  %s555 = scalar_lea.vmem %s2, 32
  %v556 = vld [vmem:[%s555] sm:$0xff]
  %v557 = vld [vmem:[%s555 + $0x8] sm:$0xff]
  %s558 = scalar_lea.vmem %s3, 32
  %v559 = vld [vmem:[%s558] sm:$0xff]
  %v560 = vld [vmem:[%s558 + $0x8] sm:$0xff]
  %562 = vset.pattern.permute.xlu0 0
  %563 = vperm.xlu0 %562, %v559
  %v564 = vpop.permute.xlu0 %563
  %567 = vset.pattern.permute.xlu0 0
  %568 = vperm.xlu0 %567, %v560
  %v569 = vpop.permute.xlu0 %568
  %v572 = vsel %vm88, %v556, 0
  %v575 = vsel %vm88, %v557, 0
  %577 = vmatprep.subr.mxu0 0.0
  %578 = vmatpush1.msra.mxu0 %v410
  %579 = vmatprep.subr.mxu0 0.0
  %580 = vmatpush1.msra.mxu0 %v411
  %581 = vmatprep.subr.mxu0 0.0
  %582 = vmatpush1.msra.mxu0 0.0
  %583 = vmatprep.subr.mxu0 0.0
  %584 = vmatpush1.msra.mxu0 0.0
  %585 = vmatprep.subr.mxu0 0.0
  %586 = vmatpush1.msra.mxu0 0.0
  %587 = vmatprep.subr.mxu0 0.0
  %588 = vmatpush1.msra.mxu0 0.0
  %589 = vmatprep.subr.mxu0 0.0
  %590 = vmatpush1.msra.mxu0 0.0
  %591 = vmatprep.subr.mxu0 0.0
  %592 = vmatpush1.msra.mxu0 0.0
  %593 = vmatprep.subr.mxu0 0.0
  %594 = vmatpush1.msra.mxu0 0.0
  %595 = vmatprep.subr.mxu0 0.0
  %596 = vmatpush1.msra.mxu0 0.0
  %597 = vmatprep.subr.mxu0 0.0
  %598 = vmatpush1.msra.mxu0 0.0
  %599 = vmatprep.subr.mxu0 0.0
  %600 = vmatpush1.msra.mxu0 0.0
  %601 = vmatprep.subr.mxu0 0.0
  %602 = vmatpush1.msra.mxu0 0.0
  %603 = vmatprep.subr.mxu0 0.0
  %604 = vmatpush1.msra.mxu0 0.0
  %605 = vmatprep.subr.mxu0 0.0
  %606 = vmatpush1.msra.mxu0 0.0
  %607 = vmatprep.subr.mxu0 0.0
  %608 = vmatpush1.msra.mxu0 0.0
  %609 = vmatprep.subr.mxu0 0.0
  %610 = vmatpush1.msra.mxu0 0.0
  %611 = vmatprep.subr.mxu0 0.0
  %612 = vmatpush1.msra.mxu0 0.0
  %613 = vmatprep.subr.mxu0 0.0
  %614 = vmatpush1.msra.mxu0 0.0
  %615 = vmatprep.subr.mxu0 0.0
  %616 = vmatpush1.msra.mxu0 0.0
  %617 = vmatprep.subr.mxu0 0.0
  %618 = vmatpush1.msra.mxu0 0.0
  %619 = vmatprep.subr.mxu0 0.0
  %620 = vmatpush1.msra.mxu0 0.0
  %621 = vmatprep.subr.mxu0 0.0
  %622 = vmatpush1.msra.mxu0 0.0
  %623 = vmatprep.subr.mxu0 0.0
  %624 = vmatpush1.msra.mxu0 0.0
  %625 = vmatprep.subr.mxu0 0.0
  %626 = vmatpush1.msra.mxu0 0.0
  %627 = vmatprep.subr.mxu0 0.0
  %628 = vmatpush1.msra.mxu0 0.0
  %629 = vmatprep.subr.mxu0 0.0
  %630 = vmatpush1.msra.mxu0 0.0
  %631 = vmatprep.subr.mxu0 0.0
  %632 = vmatpush1.msra.mxu0 0.0
  %633 = vmatprep.subr.mxu0 0.0
  %634 = vmatpush1.msra.mxu0 0.0
  %635 = vmatprep.subr.mxu0 0.0
  %636 = vmatpush1.msra.mxu0 0.0
  %637 = vmatprep.subr.mxu0 0.0
  %638 = vmatpush1.msra.mxu0 0.0
  %639 = vmatprep.subr.mxu0 0.0
  %640 = vmatpush1.msra.mxu0 0.0
  %641 = vmatprep.mubr.f32.mxu0 0.0
  %642 = vmatmul.mubr.f32.gmra.mrb[0].mxu0 %v572
  %v643 = vpop.f32.mrb[0].mxu0
  %v644 = vadd.f32 %v564, %v643
  %v645 = vpop.f32.mrb[0].mxu0
  %646 = vmatprep.mubr.f32.mxu0 0.0
  %647 = vmatmul.mubr.f32.gmra.mrb[0].mxu0 %v575
  %v648 = vpop.f32.mrb[0].mxu0
  %v649 = vadd.f32 %v569, %v648
  %v650 = vpop.f32.mrb[0].mxu0
  %651 = vdwg.mxu0
  %v652 = vtanh.pop %v644
  %v653 = vtanh.pop %v649
  %s654 = scalar_lea.vmem %s4, 64
  %v655 = vld [vmem:[%s654] sm:$0xff]
  %v656 = vld [vmem:[%s654 + $0x8] sm:$0xff]
  %v657 = vld [vmem:[%s654 + $0x10] sm:$0xff]
  %v658 = vld [vmem:[%s654 + $0x18] sm:$0xff]
  %s659 = scalar_lea.vmem %s5, 64
  %v660 = vld [vmem:[%s659] sm:$0xff]
  %v661 = vld [vmem:[%s659 + $0x8] sm:$0xff]
  %v662 = vld [vmem:[%s659 + $0x10] sm:$0xff]
  %v663 = vld [vmem:[%s659 + $0x18] sm:$0xff]
  %665 = vset.pattern.permute.xlu0 0
  %666 = vperm.xlu0 %665, %v660
  %v667 = vpop.permute.xlu0 %666
  %670 = vset.pattern.permute.xlu0 0
  %671 = vperm.xlu0 %670, %v661
  %v672 = vpop.permute.xlu0 %671
  %675 = vset.pattern.permute.xlu0 0
  %676 = vperm.xlu0 %675, %v662
  %v677 = vpop.permute.xlu0 %676
  %680 = vset.pattern.permute.xlu0 0
  %681 = vperm.xlu0 %680, %v663
  %v682 = vpop.permute.xlu0 %681
  %v685 = vsel %vm88, %v655, 0
  %v688 = vsel %vm88, %v656, 0
  %v691 = vsel %vm88, %v657, 0
  %v694 = vsel %vm88, %v658, 0
  %696 = vmatprep.subr.mxu0 0.0
  %697 = vmatpush1.msra.mxu0 %v652
  %698 = vmatprep.subr.mxu0 0.0
  %699 = vmatpush1.msra.mxu0 %v653
  %700 = vmatprep.subr.mxu0 0.0
  %701 = vmatpush1.msra.mxu0 0.0
  %702 = vmatprep.subr.mxu0 0.0
  %703 = vmatpush1.msra.mxu0 0.0
  %704 = vmatprep.subr.mxu0 0.0
  %705 = vmatpush1.msra.mxu0 0.0
  %706 = vmatprep.subr.mxu0 0.0
  %707 = vmatpush1.msra.mxu0 0.0
  %708 = vmatprep.subr.mxu0 0.0
  %709 = vmatpush1.msra.mxu0 0.0
  %710 = vmatprep.subr.mxu0 0.0
  %711 = vmatpush1.msra.mxu0 0.0
  %712 = vmatprep.subr.mxu0 0.0
  %713 = vmatpush1.msra.mxu0 0.0
  %714 = vmatprep.subr.mxu0 0.0
  %715 = vmatpush1.msra.mxu0 0.0
  %716 = vmatprep.subr.mxu0 0.0
  %717 = vmatpush1.msra.mxu0 0.0
  %718 = vmatprep.subr.mxu0 0.0
  %719 = vmatpush1.msra.mxu0 0.0
  %720 = vmatprep.subr.mxu0 0.0
  %721 = vmatpush1.msra.mxu0 0.0
  %722 = vmatprep.subr.mxu0 0.0
  %723 = vmatpush1.msra.mxu0 0.0
  %724 = vmatprep.subr.mxu0 0.0
  %725 = vmatpush1.msra.mxu0 0.0
  %726 = vmatprep.subr.mxu0 0.0
  %727 = vmatpush1.msra.mxu0 0.0
  %728 = vmatprep.subr.mxu0 0.0
  %729 = vmatpush1.msra.mxu0 0.0
  %730 = vmatprep.subr.mxu0 0.0
  %731 = vmatpush1.msra.mxu0 0.0
  %732 = vmatprep.subr.mxu0 0.0
  %733 = vmatpush1.msra.mxu0 0.0
  %734 = vmatprep.subr.mxu0 0.0
  %735 = vmatpush1.msra.mxu0 0.0
  %736 = vmatprep.subr.mxu0 0.0
  %737 = vmatpush1.msra.mxu0 0.0
  %738 = vmatprep.subr.mxu0 0.0
  %739 = vmatpush1.msra.mxu0 0.0
  %740 = vmatprep.subr.mxu0 0.0
  %741 = vmatpush1.msra.mxu0 0.0
  %742 = vmatprep.subr.mxu0 0.0
  %743 = vmatpush1.msra.mxu0 0.0
  %744 = vmatprep.subr.mxu0 0.0
  %745 = vmatpush1.msra.mxu0 0.0
  %746 = vmatprep.subr.mxu0 0.0
  %747 = vmatpush1.msra.mxu0 0.0
  %748 = vmatprep.subr.mxu0 0.0
  %749 = vmatpush1.msra.mxu0 0.0
  %750 = vmatprep.subr.mxu0 0.0
  %751 = vmatpush1.msra.mxu0 0.0
  %752 = vmatprep.subr.mxu0 0.0
  %753 = vmatpush1.msra.mxu0 0.0
  %754 = vmatprep.subr.mxu0 0.0
  %755 = vmatpush1.msra.mxu0 0.0
  %756 = vmatprep.subr.mxu0 0.0
  %757 = vmatpush1.msra.mxu0 0.0
  %758 = vmatprep.subr.mxu0 0.0
  %759 = vmatpush1.msra.mxu0 0.0
  %760 = vmatprep.mubr.f32.mxu0 0.0
  %761 = vmatmul.mubr.f32.gmra.mrb[0].mxu0 %v685
  %v762 = vpop.f32.mrb[0].mxu0
  %v763 = vadd.f32 %v667, %v762
  %v764 = vpop.f32.mrb[0].mxu0
  %765 = vmatprep.mubr.f32.mxu0 0.0
  %766 = vmatmul.mubr.f32.gmra.mrb[0].mxu0 %v688
  %v767 = vpop.f32.mrb[0].mxu0
  %v768 = vadd.f32 %v672, %v767
  %v769 = vpop.f32.mrb[0].mxu0
  %770 = vmatprep.mubr.f32.mxu0 0.0
  %771 = vmatmul.mubr.f32.gmra.mrb[0].mxu0 %v691
  %v772 = vpop.f32.mrb[0].mxu0
  %v773 = vadd.f32 %v677, %v772
  %v774 = vpop.f32.mrb[0].mxu0
  %775 = vmatprep.mubr.f32.mxu0 0.0
  %776 = vmatmul.mubr.f32.gmra.mrb[0].mxu0 %v694
  %v777 = vpop.f32.mrb[0].mxu0
  %v778 = vadd.f32 %v682, %v777
  %v779 = vpop.f32.mrb[0].mxu0
  %780 = vdwg.mxu0
  %v781 = vmul.f32 %v763, 1.442695
  %v782 = vpow.pop %v781
  %v783 = vmul.f32 %v768, 1.442695
  %v784 = vpow.pop %v783
  %v785 = vmul.f32 %v545, %v782
  %v786 = vmul.f32 %v546, %v784
  %v787 = vadd.f32 %v785, %v773
  %v788 = vadd.f32 %v786, %v778
  %v789 = vadd.f32 %v763, %v768
  %v790 = vrot.slane %v789, 4
  %v791 = vadd.f32 %v789, %v790
  %v792 = vrot.slane %v791, 2
  %v793 = vadd.f32 %v791, %v792
  %v794 = vrot.slane %v793, 1
  %v795 = vadd.f32 %v793, %v794
  %v796 = vsub.f32 %v554, %v795
  %797 = vxpose.xlu0.b32.start [1/16] %v787, 128
  %798 = vxpose.xlu0.b32.cont [2/16] %v788, 128
  %799 = vxpose.xlu0.b32.cont [3/16] 0.0, 128
  %800 = vxpose.xlu0.b32.cont [4/16] 0.0, 128
  %801 = vxpose.xlu0.b32.cont [5/16] 0.0, 128
  %802 = vxpose.xlu0.b32.cont [6/16] 0.0, 128
  %803 = vxpose.xlu0.b32.cont [7/16] 0.0, 128
  %804 = vxpose.xlu0.b32.cont [8/16] 0.0, 128
  %805 = vxpose.xlu0.b32.cont [9/16] 0.0, 128
  %806 = vxpose.xlu0.b32.cont [10/16] 0.0, 128
  %807 = vxpose.xlu0.b32.cont [11/16] 0.0, 128
  %808 = vxpose.xlu0.b32.cont [12/16] 0.0, 128
  %809 = vxpose.xlu0.b32.cont [13/16] 0.0, 128
  %810 = vxpose.xlu0.b32.cont [14/16] 0.0, 128
  %811 = vxpose.xlu0.b32.cont [15/16] 0.0, 128
  %812 = vxpose.xlu0.b32.end [16/16] 0.0, 128
  %v813 = vpop.trf.xlu0
  %v814 = vpop.trf.xlu0
  %v815 = vpop.trf.xlu0
  %v816 = vpop.trf.xlu0
  %v817 = vpop.trf.xlu0
  %v818 = vpop.trf.xlu0
  %v819 = vpop.trf.xlu0
  %v820 = vpop.trf.xlu0
  %v821 = vpop.trf.xlu0
  %v822 = vpop.trf.xlu0
  %v823 = vpop.trf.xlu0
  %v824 = vpop.trf.xlu0
  %v825 = vpop.trf.xlu0
  %v826 = vpop.trf.xlu0
  %v827 = vpop.trf.xlu0
  %v828 = vpop.trf.xlu0
  %829 = vst.msk [vmem:[%s6] sm:$0xff] %vm88, %v813
  %830 = vst.msk [vmem:[%s6 + $0x8] sm:$0xff] %vm88, %v814
  %831 = vst.msk [vmem:[%s6 + $0x10] sm:$0xff] %vm88, %v815
  %832 = vst.msk [vmem:[%s6 + $0x18] sm:$0xff] %vm88, %v816
  %833 = vst.msk [vmem:[%s6 + $0x20] sm:$0xff] %vm88, %v817
  %834 = vst.msk [vmem:[%s6 + $0x28] sm:$0xff] %vm88, %v818
  %835 = vst.msk [vmem:[%s6 + $0x30] sm:$0xff] %vm88, %v819
  %836 = vst.msk [vmem:[%s6 + $0x38] sm:$0xff] %vm88, %v820
  %837 = vst.msk [vmem:[%s6 + $0x40] sm:$0xff] %vm88, %v821
  %838 = vst.msk [vmem:[%s6 + $0x48] sm:$0xff] %vm88, %v822
  %839 = vst.msk [vmem:[%s6 + $0x50] sm:$0xff] %vm88, %v823
  %840 = vst.msk [vmem:[%s6 + $0x58] sm:$0xff] %vm88, %v824
  %841 = vst.msk [vmem:[%s6 + $0x60] sm:$0xff] %vm88, %v825
  %842 = vst.msk [vmem:[%s6 + $0x68] sm:$0xff] %vm88, %v826
  %843 = vst.msk [vmem:[%s6 + $0x70] sm:$0xff] %vm88, %v827
  %844 = vst.msk [vmem:[%s6 + $0x78] sm:$0xff] %vm88, %v828
  %845 = vst [vmem:[%s7] sm:$0x1] %v796
  // Predicated region
  $region26: #{affine_aug_flow.1} parent=0 // pred_check
    _
  $region27: #{affine_aug_flow.1} parent=0 // pred_check_branch
    %847 = sbr.rel (0) target = $region29
  $region28: #{affine_aug_flow.1} parent=0 // pred_region
    _
  $region29: #{affine_aug_flow.1} parent=0 // pred_fallthru
    _
  // Predicated region
  $region30: #{affine_aug_flow.1} parent=0 // pred_check
    _
  $region31: #{affine_aug_flow.1} parent=0 // pred_check_branch
    %849 = sbr.rel (0) target = $region33
  $region32: #{affine_aug_flow.1} parent=0 // pred_region
    _
  $region33: #{affine_aug_flow.1} parent=0 // pred_fallthru
    _
  // Predicated region
  $region34: #{affine_aug_flow.1} parent=0 // pred_check
    _
  $region35: #{affine_aug_flow.1} parent=0 // pred_check_branch
    %851 = sbr.rel (0) target = $region37
  $region36: #{affine_aug_flow.1} parent=0 // pred_region
    _
  $region37: #{affine_aug_flow.1} parent=0 // pred_fallthru
    _
  // Predicated region
  $region38: #{affine_aug_flow.1} parent=0 // pred_check
    _
  $region39: #{affine_aug_flow.1} parent=0 // pred_check_branch
    %853 = sbr.rel (0) target = $region41
  $region40: #{affine_aug_flow.1} parent=0 // pred_region
    _
  $region41: #{affine_aug_flow.1} parent=0 // pred_fallthru
    _

</llo_original>
